<compile_context>
chip_gen: v7x
topology: tpu7x:2x2x1
jax: 0.10.0
libtpu: 0.0.40
codegen_flags: <defaults>
</compile_context>

<pallas_src>
import functools

import jax
import jax.numpy as jnp
from jax.experimental import pallas as pl
from jax.experimental.pallas import tpu as pltpu


def _round_up(x, m):
    return (x + m - 1) // m * m


def vl_mapper_kernel(x_ref, g1_ref, b1_ref, w_ref, b_ref, g2_ref, b2_ref,
                     o_ref, *, eps, feat_dim, output_dim):
    """Fused LN -> Linear -> (dropout: identity at eval) -> LN -> ReLU.

    Lane axes are zero-padded (feat_dim -> F_pad, output_dim -> O_pad).
    Because x / gamma / beta / weight / bias are exact zeros on pad lanes,
    single-pass statistics with the *true* dims are exact.
    """
    x = x_ref[...].astype(jnp.float32)

    # --- LayerNorm before (over true feat_dim) ---
    s1 = jnp.sum(x, axis=-1, keepdims=True)
    sq1 = jnp.sum(x * x, axis=-1, keepdims=True)
    mean = s1 * (1.0 / feat_dim)
    var = jnp.maximum(sq1 * (1.0 / feat_dim) - mean * mean, 0.0)
    xn = (x - mean) * jax.lax.rsqrt(var + eps)
    # pad lanes of gamma/beta are 0 => xn becomes exactly 0 on pad lanes
    xn = xn * g1_ref[...] + b1_ref[...]

    # --- Linear on the MXU: narrow operands, f32 accumulation ---
    y = jnp.dot(xn.astype(w_ref.dtype), w_ref[...],
                preferred_element_type=jnp.float32)
    y = y + b_ref[...]

    # --- Dropout: eval mode => identity ---
    # TODO(synk): training-mode dropout (PRNG mask) not implemented; inference
    # forward is identity, which is what we reproduce.

    # --- LayerNorm after (over true output_dim) ---
    s2 = jnp.sum(y, axis=-1, keepdims=True)
    sq2 = jnp.sum(y * y, axis=-1, keepdims=True)
    m2 = s2 * (1.0 / output_dim)
    v2 = jnp.maximum(sq2 * (1.0 / output_dim) - m2 * m2, 0.0)
    yn = (y - m2) * jax.lax.rsqrt(v2 + eps)
    yn = yn * g2_ref[...] + b2_ref[...]

    # --- ReLU ---
    o_ref[...] = jnp.maximum(yn, 0.0).astype(o_ref.dtype)


def vl_mapper_forward(x, params, *, eps=1e-5, row_tile=256,
                      matmul_dtype=jnp.bfloat16):
    """x: (batch, seq, feat_dim). Returns (batch, seq, output_dim)."""
    g1, b1, w, b, g2, b2 = (params["ln1_g"], params["ln1_b"], params["w"],
                            params["b"], params["ln2_g"], params["ln2_b"])
    B, S, F = x.shape
    O = w.shape[1]
    M = B * S

    # Lane-dense padding (multiples of 128) for both the LN/feat axis and the
    # output axis: avoids masked vst.msk partial stores and under-filled vregs.
    F_pad = _round_up(F, 128)
    O_pad = _round_up(O, 128)

    # Row tile: multiple of the sublane pack (8 for f32, 16 for bf16); never
    # larger than the padded row count.  Tail rows are zero padding (finite
    # garbage after LN, sliced off below).
    sub = 16 if x.dtype == jnp.bfloat16 else 8
    row_tile = max(sub, min(_round_up(row_tile, sub), _round_up(M, sub)))
    M_pad = _round_up(M, row_tile)

    x2 = jnp.zeros((M_pad, F_pad), x.dtype).at[:M, :F].set(x.reshape(M, F))

    def pad_vec(v, n):
        return jnp.zeros((1, n), jnp.float32).at[0, :v.shape[0]].set(
            v.astype(jnp.float32))

    g1_2 = pad_vec(g1, F_pad)
    b1_2 = pad_vec(b1, F_pad)
    b_2 = pad_vec(b, O_pad)
    g2_2 = pad_vec(g2, O_pad)
    b2_2 = pad_vec(b2, O_pad)
    # Weight stored (feat, out) = W^T, fed in the MXU dtype (bf16 by default:
    # halves VMEM/HBM for the weight and keeps native MXU throughput).
    # TODO(synk): for F*O weights that still exceed v7x's 64 MiB VMEM, add an
    # output_dim grid axis with the second LayerNorm as a finalize pass.
    w_p = jnp.zeros((F_pad, O_pad), matmul_dtype).at[:F, :O].set(
        w.astype(matmul_dtype))

    # Explicit VMEM budget: double-buffered x/out row tiles + single-buffered
    # (pl.Buffered(1)) weight and params, with headroom, within physical VMEM.
    budget = (2 * row_tile * F_pad * x.dtype.itemsize        # x tile   (x2 buf)
              + 2 * row_tile * O_pad * x.dtype.itemsize      # out tile (x2 buf)
              + F_pad * O_pad * jnp.dtype(matmul_dtype).itemsize  # weight (x1)
              + (2 * F_pad + 3 * O_pad) * 4)                 # ln/bias   (x1)
    vmem_limit = min(max(int(1.5 * budget) + (2 << 20), 32 << 20), 100 << 20)

    const = lambda i: (0, 0)
    one_buf = pl.Buffered(1)   # constant operands: fetched once, 1 buffer

    out2 = pl.pallas_call(
        functools.partial(vl_mapper_kernel, eps=eps, feat_dim=F, output_dim=O),
        out_shape=jax.ShapeDtypeStruct((M_pad, O_pad), x.dtype),
        grid_spec=pltpu.PrefetchScalarGridSpec(
            num_scalar_prefetch=0,
            grid=(M_pad // row_tile,),
            in_specs=[
                pl.BlockSpec((row_tile, F_pad), lambda i: (i, 0)),   # x rows
                pl.BlockSpec((1, F_pad), const, pipeline_mode=one_buf),  # ln1 g
                pl.BlockSpec((1, F_pad), const, pipeline_mode=one_buf),  # ln1 b
                pl.BlockSpec((F_pad, O_pad), const, pipeline_mode=one_buf),  # W
                pl.BlockSpec((1, O_pad), const, pipeline_mode=one_buf),  # bias
                pl.BlockSpec((1, O_pad), const, pipeline_mode=one_buf),  # ln2 g
                pl.BlockSpec((1, O_pad), const, pipeline_mode=one_buf),  # ln2 b
            ],
            out_specs=pl.BlockSpec((row_tile, O_pad), lambda i: (i, 0)),
        ),
        compiler_params=pltpu.CompilerParams(
            dimension_semantics=("parallel",),      # row axis shards across TCs
            vmem_limit_bytes=vmem_limit),
    )(x2, g1_2, b1_2, w_p, b_2, g2_2, b2_2)

    return out2[:M, :O].reshape(B, S, O)


def init_params(key, feat_dim, output_dim):
    kw, kb = jax.random.split(key)
    bound = 1.0 / (feat_dim ** 0.5)
    return {
        # nn.LayerNorm(feat_dim): gamma=1, beta=0
        "ln1_g": jnp.ones((feat_dim,), jnp.float32),
        "ln1_b": jnp.zeros((feat_dim,), jnp.float32),
        # nn.Linear(feat_dim, output_dim); stored as (feat, out) = W^T
        "w": jax.random.uniform(kw, (feat_dim, output_dim), jnp.float32,
                                -bound, bound),
        "b": jax.random.uniform(kb, (output_dim,), jnp.float32,
                                -bound, bound),
        # nn.LayerNorm(output_dim)
        "ln2_g": jnp.ones((output_dim,), jnp.float32),
        "ln2_b": jnp.zeros((output_dim,), jnp.float32),
    }


def reference_forward(x, params, eps=1e-5):
    """Pure-JAX reference mirroring the PyTorch forward (eval mode)."""
    g1, b1, w, b, g2, b2 = (params["ln1_g"], params["ln1_b"], params["w"],
                            params["b"], params["ln2_g"], params["ln2_b"])
    mean = jnp.mean(x, -1, keepdims=True)
    var = jnp.mean((x - mean) ** 2, -1, keepdims=True)
    h = (x - mean) * jax.lax.rsqrt(var + eps) * g1 + b1
    h = h @ w + b
    m2 = jnp.mean(h, -1, keepdims=True)
    v2 = jnp.mean((h - m2) ** 2, -1, keepdims=True)
    h = (h - m2) * jax.lax.rsqrt(v2 + eps) * g2 + b2
    return jnp.maximum(h, 0.0)


if __name__ == "__main__":
    key = jax.random.PRNGKey(0)
    k_x, k_p = jax.random.split(key)

    batch, seq, feat_dim, output_dim = 2, 8, 32, 64
    x = jax.random.normal(k_x, (batch, seq, feat_dim), jnp.float32)
    params = init_params(k_p, feat_dim, output_dim)

    ref = reference_forward(x, params)

    # f32 matmul path: tight check against the PyTorch-equivalent reference.
    out_f32 = jax.block_until_ready(
        vl_mapper_forward(x, params, matmul_dtype=jnp.float32))
    assert out_f32.shape == (batch, seq, output_dim)
    assert jnp.allclose(out_f32, ref, atol=1e-4, rtol=1e-4)

    # Default fast path: bf16 MXU operands, f32 accumulation.
    out = jax.block_until_ready(vl_mapper_forward(x, params))
    assert out.shape == (batch, seq, output_dim)
    assert jnp.allclose(out, ref, atol=5e-2, rtol=5e-2)

    print("KERNEL_OK")
</pallas_src>

<mosaic_0001>
module attributes {stable_mosaic.version = 11 : i64} {
  func.func @vl_mapper_kernel(%arg0: i32, %arg1: memref<16x128xf32, #tpu.memory_space<vmem>>, %arg2: memref<1x128xf32, #tpu.memory_space<vmem>>, %arg3: memref<1x128xf32, #tpu.memory_space<vmem>>, %arg4: memref<128x128xf32, #tpu.memory_space<vmem>>, %arg5: memref<1x128xf32, #tpu.memory_space<vmem>>, %arg6: memref<1x128xf32, #tpu.memory_space<vmem>>, %arg7: memref<1x128xf32, #tpu.memory_space<vmem>>, %arg8: memref<16x128xf32, #tpu.memory_space<vmem>>) attributes {dimension_semantics = [#tpu.dimension_semantics<parallel>], iteration_bounds = array<i64: 1>, scalar_prefetch = 0 : i64, scratch_operands = 0 : i64, tpu.core_type = #tpu.core_type<tc>, window_params = [{transform_indices = @transform_0, window_bounds = array<i64: 16, 128>}, {pipeline_mode = #tpu.pipeline_mode<synchronous>, transform_indices = @transform_1, window_bounds = array<i64: 1, 128>}, {pipeline_mode = #tpu.pipeline_mode<synchronous>, transform_indices = @transform_2, window_bounds = array<i64: 1, 128>}, {pipeline_mode = #tpu.pipeline_mode<synchronous>, transform_indices = @transform_3, window_bounds = array<i64: 128, 128>}, {pipeline_mode = #tpu.pipeline_mode<synchronous>, transform_indices = @transform_4, window_bounds = array<i64: 1, 128>}, {pipeline_mode = #tpu.pipeline_mode<synchronous>, transform_indices = @transform_5, window_bounds = array<i64: 1, 128>}, {pipeline_mode = #tpu.pipeline_mode<synchronous>, transform_indices = @transform_6, window_bounds = array<i64: 1, 128>}, {transform_indices = @transform_7, window_bounds = array<i64: 16, 128>}]} {
    %c0 = arith.constant 0 : index
    %c0_0 = arith.constant 0 : index
    %0 = vector.load %arg1[%c0, %c0_0] : memref<16x128xf32, #tpu.memory_space<vmem>>, vector<16x128xf32>
    %cst = arith.constant dense<0.000000e+00> : vector<16xf32>
    %1 = vector.multi_reduction <add>, %0, %cst [1] : vector<16x128xf32> to vector<16xf32>
    %2 = vector.shape_cast %1 : vector<16xf32> to vector<16x1xf32>
    %3 = arith.mulf %0, %0 : vector<16x128xf32>
    %cst_1 = arith.constant dense<0.000000e+00> : vector<16xf32>
    %4 = vector.multi_reduction <add>, %3, %cst_1 [1] : vector<16x128xf32> to vector<16xf32>
    %5 = vector.shape_cast %4 : vector<16xf32> to vector<16x1xf32>
    %cst_2 = arith.constant 3.125000e-02 : f32
    %6 = vector.broadcast %cst_2 : f32 to vector<16x1xf32>
    %7 = arith.mulf %2, %6 : vector<16x1xf32>
    %cst_3 = arith.constant 3.125000e-02 : f32
    %8 = vector.broadcast %cst_3 : f32 to vector<16x1xf32>
    %9 = arith.mulf %5, %8 : vector<16x1xf32>
    %10 = arith.mulf %7, %7 : vector<16x1xf32>
    %11 = arith.subf %9, %10 : vector<16x1xf32>
    %cst_4 = arith.constant 0.000000e+00 : f32
    %12 = vector.broadcast %cst_4 : f32 to vector<16x1xf32>
    %13 = arith.maximumf %11, %12 : vector<16x1xf32>
    %14 = vector.broadcast %7 : vector<16x1xf32> to vector<16x128xf32>
    %15 = arith.subf %0, %14 : vector<16x128xf32>
    %cst_5 = arith.constant 9.99999974E-6 : f32
    %16 = vector.broadcast %cst_5 : f32 to vector<16x1xf32>
    %17 = arith.addf %13, %16 : vector<16x1xf32>
    %18 = math.rsqrt %17 : vector<16x1xf32>
    %19 = vector.broadcast %18 : vector<16x1xf32> to vector<16x128xf32>
    %20 = arith.mulf %15, %19 : vector<16x128xf32>
    %c0_6 = arith.constant 0 : index
    %c0_7 = arith.constant 0 : index
    %21 = vector.load %arg2[%c0_6, %c0_7] : memref<1x128xf32, #tpu.memory_space<vmem>>, vector<1x128xf32>
    %22 = vector.broadcast %21 : vector<1x128xf32> to vector<16x128xf32>
    %23 = arith.mulf %20, %22 : vector<16x128xf32>
    %c0_8 = arith.constant 0 : index
    %c0_9 = arith.constant 0 : index
    %24 = vector.load %arg3[%c0_8, %c0_9] : memref<1x128xf32, #tpu.memory_space<vmem>>, vector<1x128xf32>
    %25 = vector.broadcast %24 : vector<1x128xf32> to vector<16x128xf32>
    %26 = arith.addf %23, %25 : vector<16x128xf32>
    %c0_10 = arith.constant 0 : index
    %c0_11 = arith.constant 0 : index
    %27 = vector.load %arg4[%c0_10, %c0_11] : memref<128x128xf32, #tpu.memory_space<vmem>>, vector<128x128xf32>
    %cst_12 = arith.constant dense<0.000000e+00> : vector<16x128xf32>
    %28 = tpu.matmul %26, %27, %cst_12 {dimension_numbers = #tpu.dot_dimension_numbers<[1], [0], [0], [1], [0, 0, 1, 1], [], []>} : vector<16x128xf32>, vector<128x128xf32>, vector<16x128xf32> -> vector<16x128xf32>
    %c0_13 = arith.constant 0 : index
    %c0_14 = arith.constant 0 : index
    %29 = vector.load %arg5[%c0_13, %c0_14] : memref<1x128xf32, #tpu.memory_space<vmem>>, vector<1x128xf32>
    %30 = vector.broadcast %29 : vector<1x128xf32> to vector<16x128xf32>
    %31 = arith.addf %28, %30 : vector<16x128xf32>
    %cst_15 = arith.constant dense<0.000000e+00> : vector<16xf32>
    %32 = vector.multi_reduction <add>, %31, %cst_15 [1] : vector<16x128xf32> to vector<16xf32>
    %33 = vector.shape_cast %32 : vector<16xf32> to vector<16x1xf32>
    %34 = arith.mulf %31, %31 : vector<16x128xf32>
    %cst_16 = arith.constant dense<0.000000e+00> : vector<16xf32>
    %35 = vector.multi_reduction <add>, %34, %cst_16 [1] : vector<16x128xf32> to vector<16xf32>
    %36 = vector.shape_cast %35 : vector<16xf32> to vector<16x1xf32>
    %cst_17 = arith.constant 1.562500e-02 : f32
    %37 = vector.broadcast %cst_17 : f32 to vector<16x1xf32>
    %38 = arith.mulf %33, %37 : vector<16x1xf32>
    %cst_18 = arith.constant 1.562500e-02 : f32
    %39 = vector.broadcast %cst_18 : f32 to vector<16x1xf32>
    %40 = arith.mulf %36, %39 : vector<16x1xf32>
    %41 = arith.mulf %38, %38 : vector<16x1xf32>
    %42 = arith.subf %40, %41 : vector<16x1xf32>
    %cst_19 = arith.constant 0.000000e+00 : f32
    %43 = vector.broadcast %cst_19 : f32 to vector<16x1xf32>
    %44 = arith.maximumf %42, %43 : vector<16x1xf32>
    %45 = vector.broadcast %38 : vector<16x1xf32> to vector<16x128xf32>
    %46 = arith.subf %31, %45 : vector<16x128xf32>
    %cst_20 = arith.constant 9.99999974E-6 : f32
    %47 = vector.broadcast %cst_20 : f32 to vector<16x1xf32>
    %48 = arith.addf %44, %47 : vector<16x1xf32>
    %49 = math.rsqrt %48 : vector<16x1xf32>
    %50 = vector.broadcast %49 : vector<16x1xf32> to vector<16x128xf32>
    %51 = arith.mulf %46, %50 : vector<16x128xf32>
    %c0_21 = arith.constant 0 : index
    %c0_22 = arith.constant 0 : index
    %52 = vector.load %arg6[%c0_21, %c0_22] : memref<1x128xf32, #tpu.memory_space<vmem>>, vector<1x128xf32>
    %53 = vector.broadcast %52 : vector<1x128xf32> to vector<16x128xf32>
    %54 = arith.mulf %51, %53 : vector<16x128xf32>
    %c0_23 = arith.constant 0 : index
    %c0_24 = arith.constant 0 : index
    %55 = vector.load %arg7[%c0_23, %c0_24] : memref<1x128xf32, #tpu.memory_space<vmem>>, vector<1x128xf32>
    %56 = vector.broadcast %55 : vector<1x128xf32> to vector<16x128xf32>
    %57 = arith.addf %54, %56 : vector<16x128xf32>
    %cst_25 = arith.constant 0.000000e+00 : f32
    %58 = vector.broadcast %cst_25 : f32 to vector<16x128xf32>
    %59 = arith.maximumf %57, %58 : vector<16x128xf32>
    %c0_26 = arith.constant 0 : index
    %c0_27 = arith.constant 0 : index
    %60 = vector.load %arg8[%c0_26, %c0_27] : memref<16x128xf32, #tpu.memory_space<vmem>>, vector<16x128xf32>
    tpu.vector_store %arg8[%c0_26, %c0_27], %59 {strides = array<i32>} : memref<16x128xf32, #tpu.memory_space<vmem>>, vector<16x128xf32>,
    return
  }
  func.func @transform_0(%arg0: i32) -> (i32, i32) {
    %c0_i32 = arith.constant 0 : i32
    %c0_i32_0 = arith.constant 0 : i32
    return %arg0, %c0_i32 : i32, i32
  }
  func.func @transform_1(%arg0: i32) -> (i32, i32) {
    %c0_i32 = arith.constant 0 : i32
    %c0_i32_0 = arith.constant 0 : i32
    %c0_i32_1 = arith.constant 0 : i32
    return %c0_i32, %c0_i32_0 : i32, i32
  }
  func.func @transform_2(%arg0: i32) -> (i32, i32) {
    %c0_i32 = arith.constant 0 : i32
    %c0_i32_0 = arith.constant 0 : i32
    %c0_i32_1 = arith.constant 0 : i32
    return %c0_i32, %c0_i32_0 : i32, i32
  }
  func.func @transform_3(%arg0: i32) -> (i32, i32) {
    %c0_i32 = arith.constant 0 : i32
    %c0_i32_0 = arith.constant 0 : i32
    %c0_i32_1 = arith.constant 0 : i32
    return %c0_i32, %c0_i32_0 : i32, i32
  }
  func.func @transform_4(%arg0: i32) -> (i32, i32) {
    %c0_i32 = arith.constant 0 : i32
    %c0_i32_0 = arith.constant 0 : i32
    %c0_i32_1 = arith.constant 0 : i32
    return %c0_i32, %c0_i32_0 : i32, i32
  }
  func.func @transform_5(%arg0: i32) -> (i32, i32) {
    %c0_i32 = arith.constant 0 : i32
    %c0_i32_0 = arith.constant 0 : i32
    %c0_i32_1 = arith.constant 0 : i32
    return %c0_i32, %c0_i32_0 : i32, i32
  }
  func.func @transform_6(%arg0: i32) -> (i32, i32) {
    %c0_i32 = arith.constant 0 : i32
    %c0_i32_0 = arith.constant 0 : i32
    %c0_i32_1 = arith.constant 0 : i32
    return %c0_i32, %c0_i32_0 : i32, i32
  }
  func.func @transform_7(%arg0: i32) -> (i32, i32) {
    %c0_i32 = arith.constant 0 : i32
    %c0_i32_0 = arith.constant 0 : i32
    return %arg0, %c0_i32 : i32, i32
  }
}

</mosaic_0001>

<llo_original>
// kernel: tpu_custom_call.1
$region0: #{tpu_custom_call.1}
  #allocation0 [shape = 'u32[]', space=smem, size = 0x4, offset = 0x4, fixed_abs, tag = 'smem constant byte address 0x4 - core index']
  #allocation1 [shape = 'u32[144,128]{1,0:T(1,128)}', space=vmem, size = 0x12000, scoped, tag = 'internal scratch']
  %s0 = inlined_call_operand.hbm [shape: f32[16,128], index: 0, kind: input, shape index: {}]
  %s1 = inlined_call_operand.vmem [shape: f32[1,128], index: 1, kind: input, shape index: {}]
  %s2 = inlined_call_operand.vmem [shape: f32[1,128], index: 2, kind: input, shape index: {}]
  %s3 = inlined_call_operand.hbm [shape: f32[128,128], index: 3, kind: input, shape index: {}]
  %s4 = inlined_call_operand.vmem [shape: f32[1,128], index: 4, kind: input, shape index: {}]
  %s5 = inlined_call_operand.vmem [shape: f32[1,128], index: 5, kind: input, shape index: {}]
  %s6 = inlined_call_operand.vmem [shape: f32[1,128], index: 6, kind: input, shape index: {}]
  %s7 = inlined_call_operand.hbm [shape: f32[16,128], index: 7, kind: output, shape index: {}]
  %s8 = sld [smem:[#allocation0]]
  $region46: #{tpu_custom_call.1} parent=0
    _
  %s10 = ssub.s32 1, %s8
  %s11 = scalar_select 0, %s10, %s8
  $region1: #{tpu_custom_call.1} parent=0
    #allocation2 [shape = 'u8[8192]{0}', space=vmem, size = 0x2000, scoped, tag = 'input window, operand 0, single buffered']
    #allocation3 [shape = 's32[1]{0}', space=sflag, size = 0x4, scoped, tag = 'scoped memory for tpu_custom_call.1']
    #allocation4 [shape = 's32[1]{0}', space=sflag, size = 0x4, scoped, tag = 'scoped memory for tpu_custom_call.1']
    #allocation5 [shape = 'u8[65536]{0}', space=vmem, size = 0x10000, scoped, tag = 'input window, operand 3, single buffered']
    #allocation6 [shape = 's32[1]{0}', space=sflag, size = 0x4, scoped, tag = 'scoped memory for tpu_custom_call.1']
    #allocation7 [shape = 'u8[8192]{0}', space=vmem, size = 0x2000, scoped, tag = 'output window, operand 0, single buffered']
    %12 = vsyncpa [#allocation3], 0
    %13 = vsyncpa [#allocation6], 0
    %14 = vsyncpa [#allocation4], 0
    // Predicated region
    $region2: #{tpu_custom_call.1} parent=1 // pred_check
      _
    $region3: #{tpu_custom_call.1} parent=1 // pred_check_branch
      %16 = sbr.rel (0) target = $region5
    $region4: #{tpu_custom_call.1} parent=1 // pred_region
      %s18 = ssub.s32 256, 256
      %19 = vsyncadd [#allocation3], %s18
      %s20 = sshll.u32 [#allocation2], 4
      %s21 = int_to_ptr.vmem [resolvable:$true] %s20
      %26 = dma.hbm_to_vmem [thread:$0]  %s0, 256, %s21, [#allocation3], 128, 128, 8
    $region5: #{tpu_custom_call.1} parent=1 // pred_fallthru
      _
    // Predicated region
    $region6: #{tpu_custom_call.1} parent=1 // pred_check
      _
    $region7: #{tpu_custom_call.1} parent=1 // pred_check_branch
      %28 = sbr.rel (0) target = $region9
    $region8: #{tpu_custom_call.1} parent=1 // pred_region
      _
    $region9: #{tpu_custom_call.1} parent=1 // pred_fallthru
      _
    // Predicated region
    $region10: #{tpu_custom_call.1} parent=1 // pred_check
      _
    $region11: #{tpu_custom_call.1} parent=1 // pred_check_branch
      %30 = sbr.rel (0) target = $region13
    $region12: #{tpu_custom_call.1} parent=1 // pred_region
      _
    $region13: #{tpu_custom_call.1} parent=1 // pred_fallthru
      _
    // Predicated region
    $region14: #{tpu_custom_call.1} parent=1 // pred_check
      _
    $region15: #{tpu_custom_call.1} parent=1 // pred_check_branch
      %32 = sbr.rel (0) target = $region17
    $region16: #{tpu_custom_call.1} parent=1 // pred_region
      %s34 = ssub.s32 2048, 2048
      %35 = vsyncadd [#allocation6], %s34
      %s36 = sshll.u32 [#allocation5], 4
      %s37 = int_to_ptr.vmem [resolvable:$true] %s36
      %42 = dma.hbm_to_vmem [thread:$0]  %s3, 2048, %s37, [#allocation6], 128, 128, 8
    $region17: #{tpu_custom_call.1} parent=1 // pred_fallthru
      _
    // Predicated region
    $region18: #{tpu_custom_call.1} parent=1 // pred_check
      _
    $region19: #{tpu_custom_call.1} parent=1 // pred_check_branch
      %44 = sbr.rel (0) target = $region21
    $region20: #{tpu_custom_call.1} parent=1 // pred_region
      _
    $region21: #{tpu_custom_call.1} parent=1 // pred_fallthru
      _
    // Predicated region
    $region22: #{tpu_custom_call.1} parent=1 // pred_check
      _
    $region23: #{tpu_custom_call.1} parent=1 // pred_check_branch
      %46 = sbr.rel (0) target = $region25
    $region24: #{tpu_custom_call.1} parent=1 // pred_region
      _
    $region25: #{tpu_custom_call.1} parent=1 // pred_fallthru
      _
    // Predicated region
    $region26: #{tpu_custom_call.1} parent=1 // pred_check
      _
    $region27: #{tpu_custom_call.1} parent=1 // pred_check_branch
      %48 = sbr.rel (0) target = $region29
    $region28: #{tpu_custom_call.1} parent=1 // pred_region
      _
    $region29: #{tpu_custom_call.1} parent=1 // pred_fallthru
      _
    // Predicated region
    $region30: #{tpu_custom_call.1} parent=1 // pred_check
      _
    $region31: #{tpu_custom_call.1} parent=1 // pred_check_branch
      %50 = sbr.rel (0) target = $region33
    $region32: #{tpu_custom_call.1} parent=1 // pred_region
      %51 = dma.done [#allocation3], 256
    $region33: #{tpu_custom_call.1} parent=1 // pred_fallthru
      _
    // Predicated region
    $region34: #{tpu_custom_call.1} parent=1 // pred_check
      _
    $region35: #{tpu_custom_call.1} parent=1 // pred_check_branch
      %53 = sbr.rel (0) target = $region37
    $region36: #{tpu_custom_call.1} parent=1 // pred_region
      %54 = dma.done [#allocation6], 2048
    $region37: #{tpu_custom_call.1} parent=1 // pred_fallthru
      _
    %v55 = vld [vmem:[#allocation2] sm:$0xff]
    %v56 = vld [vmem:[#allocation2 + $0x8] sm:$0xff]
    %57 = vadd.xlane.f32.xlu0 %v55
    %v58 = vpop.xlane.xlu0 %57
    %59 = vadd.xlane.f32.xlu0 %v56
    %v60 = vpop.xlane.xlu0 %59
    %v61 = vmul.f32 %v55, %v55
    %v62 = vmul.f32 %v56, %v56
    %63 = vadd.xlane.f32.xlu0 %v61
    %v64 = vpop.xlane.xlu0 %63
    %65 = vadd.xlane.f32.xlu0 %v62
    %v66 = vpop.xlane.xlu0 %65
    %v67 = vmul.f32 %v58, 0.03125
    %v68 = vmul.f32 %v60, 0.03125
    %v69 = vmul.f32 %v64, 0.03125
    %v70 = vmul.f32 %v66, 0.03125
    %v71 = vmul.f32 %v67, %v67
    %v72 = vmul.f32 %v68, %v68
    %v73 = vsub.f32 %v69, %v71
    %v74 = vsub.f32 %v70, %v72
    %v75 = vmax.f32 %v73, 0.0
    %v76 = vmax.f32 %v74, 0.0
    %v77 = vsub.f32 %v55, %v67
    %v78 = vsub.f32 %v56, %v68
    %v79 = vadd.f32 %v75, 1e-05
    %v80 = vadd.f32 %v76, 1e-05
    %v81 = vrsqrt.pop %v79
    %v82 = vrsqrt.pop %v80
    %v83 = vmul.f32 %v77, %v81
    %v84 = vmul.f32 %v78, %v82
    %v85 = vld [vmem:[%s1] sm:$0x1]
    %v87 = vlaneseq
    %v88 = vshrl.u32 %v87, 7
    %v89 = vsub.s32 0, %v88
    %v90 = vrot.slane %v85, %v89
    %v92 = vmul.f32 %v83, %v90
    %v93 = vmul.f32 %v84, %v90
    %v94 = vld [vmem:[%s2] sm:$0x1]
    %v96 = vlaneseq
    %v97 = vshrl.u32 %v96, 7
    %v98 = vsub.s32 0, %v97
    %v99 = vrot.slane %v94, %v98
    %v101 = vadd.f32 %v92, %v99
    %v102 = vadd.f32 %v93, %v99
    %v103 = vld [vmem:[#allocation5] sm:$0xff]
    %v104 = vld [vmem:[#allocation5 + $0x8] sm:$0xff]
    %v105 = vld [vmem:[#allocation5 + $0x10] sm:$0xff]
    %v106 = vld [vmem:[#allocation5 + $0x18] sm:$0xff]
    %v107 = vld [vmem:[#allocation5 + $0x20] sm:$0xff]
    %v108 = vld [vmem:[#allocation5 + $0x28] sm:$0xff]
    %v109 = vld [vmem:[#allocation5 + $0x30] sm:$0xff]
    %v110 = vld [vmem:[#allocation5 + $0x38] sm:$0xff]
    %v111 = vld [vmem:[#allocation5 + $0x40] sm:$0xff]
    %v112 = vld [vmem:[#allocation5 + $0x48] sm:$0xff]
    %v113 = vld [vmem:[#allocation5 + $0x50] sm:$0xff]
    %v114 = vld [vmem:[#allocation5 + $0x58] sm:$0xff]
    %v115 = vld [vmem:[#allocation5 + $0x60] sm:$0xff]
    %v116 = vld [vmem:[#allocation5 + $0x68] sm:$0xff]
    %v117 = vld [vmem:[#allocation5 + $0x70] sm:$0xff]
    %v118 = vld [vmem:[#allocation5 + $0x78] sm:$0xff]
    %v119 = vld [vmem:[%s4] sm:$0x1]
    %v121 = vlaneseq
    %v122 = vshrl.u32 %v121, 7
    %v123 = vsub.s32 0, %v122
    %v124 = vrot.slane %v119, %v123
    %126 = vmatprep.subr.mxu0 0.0
    %127 = vmatpush1.msra.mxu0 %v103
    %128 = vmatprep.subr.mxu0 0.0
    %129 = vmatpush1.msra.mxu0 %v104
    %130 = vmatprep.subr.mxu0 0.0
    %131 = vmatpush1.msra.mxu0 %v105
    %132 = vmatprep.subr.mxu0 0.0
    %133 = vmatpush1.msra.mxu0 %v106
    %134 = vmatprep.subr.mxu0 0.0
    %135 = vmatpush1.msra.mxu0 %v107
    %136 = vmatprep.subr.mxu0 0.0
    %137 = vmatpush1.msra.mxu0 %v108
    %138 = vmatprep.subr.mxu0 0.0
    %139 = vmatpush1.msra.mxu0 %v109
    %140 = vmatprep.subr.mxu0 0.0
    %141 = vmatpush1.msra.mxu0 %v110
    %142 = vmatprep.subr.mxu0 0.0
    %143 = vmatpush1.msra.mxu0 %v111
    %144 = vmatprep.subr.mxu0 0.0
    %145 = vmatpush1.msra.mxu0 %v112
    %146 = vmatprep.subr.mxu0 0.0
    %147 = vmatpush1.msra.mxu0 %v113
    %148 = vmatprep.subr.mxu0 0.0
    %149 = vmatpush1.msra.mxu0 %v114
    %150 = vmatprep.subr.mxu0 0.0
    %151 = vmatpush1.msra.mxu0 %v115
    %152 = vmatprep.subr.mxu0 0.0
    %153 = vmatpush1.msra.mxu0 %v116
    %154 = vmatprep.subr.mxu0 0.0
    %155 = vmatpush1.msra.mxu0 %v117
    %156 = vmatprep.subr.mxu0 0.0
    %157 = vmatpush1.msra.mxu0 %v118
    %158 = vmatprep.subr.mxu0 0.0
    %159 = vmatpush1.msra.mxu0 0.0
    %160 = vmatprep.subr.mxu0 0.0
    %161 = vmatpush1.msra.mxu0 0.0
    %162 = vmatprep.subr.mxu0 0.0
    %163 = vmatpush1.msra.mxu0 0.0
    %164 = vmatprep.subr.mxu0 0.0
    %165 = vmatpush1.msra.mxu0 0.0
    %166 = vmatprep.subr.mxu0 0.0
    %167 = vmatpush1.msra.mxu0 0.0
    %168 = vmatprep.subr.mxu0 0.0
    %169 = vmatpush1.msra.mxu0 0.0
    %170 = vmatprep.subr.mxu0 0.0
    %171 = vmatpush1.msra.mxu0 0.0
    %172 = vmatprep.subr.mxu0 0.0
    %173 = vmatpush1.msra.mxu0 0.0
    %174 = vmatprep.subr.mxu0 0.0
    %175 = vmatpush1.msra.mxu0 0.0
    %176 = vmatprep.subr.mxu0 0.0
    %177 = vmatpush1.msra.mxu0 0.0
    %178 = vmatprep.subr.mxu0 0.0
    %179 = vmatpush1.msra.mxu0 0.0
    %180 = vmatprep.subr.mxu0 0.0
    %181 = vmatpush1.msra.mxu0 0.0
    %182 = vmatprep.subr.mxu0 0.0
    %183 = vmatpush1.msra.mxu0 0.0
    %184 = vmatprep.subr.mxu0 0.0
    %185 = vmatpush1.msra.mxu0 0.0
    %186 = vmatprep.subr.mxu0 0.0
    %187 = vmatpush1.msra.mxu0 0.0
    %188 = vmatprep.subr.mxu0 0.0
    %189 = vmatpush1.msra.mxu0 0.0
    %190 = vmatprep.mubr.f32.mxu0 0.0
    %191 = vmatmul.mubr.f32.gmra.mrb[0].mxu0 %v101
    %v192 = vpop.f32.mrb[0].mxu0
    %v193 = vadd.f32 %v124, %v192
    %v194 = vpop.f32.mrb[0].mxu0
    %195 = vmatprep.mubr.f32.mxu0 0.0
    %196 = vmatmul.mubr.f32.gmra.mrb[0].mxu0 %v102
    %v197 = vpop.f32.mrb[0].mxu0
    %v198 = vadd.f32 %v124, %v197
    %v199 = vpop.f32.mrb[0].mxu0
    %200 = vdwg.mxu0
    %201 = vadd.xlane.f32.xlu0 %v193
    %v202 = vpop.xlane.xlu0 %201
    %203 = vadd.xlane.f32.xlu0 %v198
    %v204 = vpop.xlane.xlu0 %203
    %v205 = vmul.f32 %v193, %v193
    %v206 = vmul.f32 %v198, %v198
    %207 = vadd.xlane.f32.xlu0 %v205
    %v208 = vpop.xlane.xlu0 %207
    %209 = vadd.xlane.f32.xlu0 %v206
    %v210 = vpop.xlane.xlu0 %209
    %v211 = vmul.f32 %v202, 0.015625
    %v212 = vmul.f32 %v204, 0.015625
    %v213 = vmul.f32 %v208, 0.015625
    %v214 = vmul.f32 %v210, 0.015625
    %v215 = vmul.f32 %v211, %v211
    %v216 = vmul.f32 %v212, %v212
    %v217 = vsub.f32 %v213, %v215
    %v218 = vsub.f32 %v214, %v216
    %v219 = vmax.f32 %v217, 0.0
    %v220 = vmax.f32 %v218, 0.0
    %v221 = vsub.f32 %v193, %v211
    %v222 = vsub.f32 %v198, %v212
    %v223 = vadd.f32 %v219, 1e-05
    %v224 = vadd.f32 %v220, 1e-05
    %v225 = vrsqrt.pop %v223
    %v226 = vrsqrt.pop %v224
    %v227 = vmul.f32 %v221, %v225
    %v228 = vmul.f32 %v222, %v226
    %v229 = vld [vmem:[%s5] sm:$0x1]
    %v231 = vlaneseq
    %v232 = vshrl.u32 %v231, 7
    %v233 = vsub.s32 0, %v232
    %v234 = vrot.slane %v229, %v233
    %v236 = vmul.f32 %v227, %v234
    %v237 = vmul.f32 %v228, %v234
    %v238 = vld [vmem:[%s6] sm:$0x1]
    %v240 = vlaneseq
    %v241 = vshrl.u32 %v240, 7
    %v242 = vsub.s32 0, %v241
    %v243 = vrot.slane %v238, %v242
    %v245 = vadd.f32 %v236, %v243
    %v246 = vadd.f32 %v237, %v243
    %v247 = vmax.f32 %v245, 0.0
    %v248 = vmax.f32 %v246, 0.0
    %249 = vst [vmem:[#allocation7] sm:$0xff] %v247
    %250 = vst [vmem:[#allocation7 + $0x8] sm:$0xff] %v248
    // Predicated region
    $region38: #{tpu_custom_call.1} parent=1 // pred_check
      _
    $region39: #{tpu_custom_call.1} parent=1 // pred_check_branch
      %252 = sbr.rel (0) target = $region41
    $region40: #{tpu_custom_call.1} parent=1 // pred_region
      %s254 = ssub.s32 256, 256
      %255 = vsyncadd [#allocation4], %s254
      %s256 = sshll.u32 [#allocation7], 4
      %s257 = int_to_ptr.vmem [resolvable:$true] %s256
      %262 = dma.vmem_to_hbm [thread:$0]  %s257, 256, %s7, [#allocation4], 128, 128, 8
    $region41: #{tpu_custom_call.1} parent=1 // pred_fallthru
      _
    // Predicated region
    $region42: #{tpu_custom_call.1} parent=1 // pred_check
      _
    $region43: #{tpu_custom_call.1} parent=1 // pred_check_branch
      %264 = sbr.rel (0) target = $region45
    $region44: #{tpu_custom_call.1} parent=1 // pred_region
      %265 = dma.done [#allocation4], 256
    $region45: #{tpu_custom_call.1} parent=1 // pred_fallthru
      _
    %266 = vsyncpa [#allocation3], 1
    %267 = vsyncpa [#allocation6], 1
    %268 = vsyncpa [#allocation4], 1

</llo_original>
